<compile_context>
chip_gen: v7x
topology: tpu7x:2x2x1
jax: 0.10.0
libtpu: 0.0.40
codegen_flags: <defaults>
</compile_context>

<pallas_src>
import jax
import jax.numpy as jnp
from jax.experimental import pallas as pl
from jax.experimental.pallas import tpu as pltpu

_EPS = 1e-8
_SLOPE = 0.2


def _lrelu(x):
    return jnp.where(x >= 0.0, x, _SLOPE * x)


def _ceil8(n):
    return ((n + 7) // 8) * 8


def _col_layout(kkc1, c_mid, c_rgb):
    """Sublane-aligned packing of the per-batch column operands into one array."""
    fields = (("s1t", kkc1), ("si1", c_mid), ("s2", c_mid), ("si2", c_mid),
              ("s3", c_mid), ("b1", c_mid), ("b2", c_mid), ("b3", c_rgb))
    offs, cur = {}, 0
    for name, ln in fields:
        offs[name] = (cur, ln)
        cur += _ceil8(ln)
    return offs, cur


# ----------------------------------------------------------------------------
# Fused kernel: (StyleBlock1 -> StyleBlock2 -> ToRGB) for one batch element.
# All tensors are pixel-minor: (channels_or_taps, H*W).
# ----------------------------------------------------------------------------
def _make_fused_kernel(H, W, K, c_in, c_mid, c_rgb):
    KK = K * K
    HW = H * W
    KKC1 = KK * c_in
    offs, _ = _col_layout(KKC1, c_mid, c_rgb)
    f32, bf16 = jnp.float32, jnp.bfloat16

    def kernel(p1_ref, col_ref, noise_ref, mask_ref, w1t_ref, w2t_ref, w3t_ref,
               x_out_ref, rgb_ref):
        col = col_ref[0]                                   # (ncol, 1) f32

        def seg(name):
            o, ln = offs[name]
            return col[o:o + ln, :]                        # (ln, 1), aligned sublane slice

        nz = noise_ref[0]                                  # (2, HW) f32, scale_noise folded in
        n1, n2 = nz[0:1, :], nz[1:2, :]                    # broadcast over channel sublanes
        m = mask_ref[...]                                  # (2, HW) f32
        mask_l, mask_r = m[0:1, :], m[1:2, :]              # dest x==0 / x==W-1 invalid

        # ---------------- StyleBlock 1 (im2col patches come from the wrapper) ------
        xs1 = (p1_ref[0] * seg("s1t")).astype(bf16)        # (KK*c_in, HW) modulated
        acc1 = jnp.dot(w1t_ref[...], xs1,
                       preferred_element_type=f32)         # (c_mid, HW)
        y1 = _lrelu(acc1 * seg("si1") + n1 + seg("b1"))    # demod + noise + bias + lrelu

        # ---------------- StyleBlock 2 (in-kernel tap shifts of y1) ----------------
        y1m = y1 * seg("s2")                               # modulated, f32
        taps = []
        for dy in (-1, 0, 1):
            for dx in (-1, 0, 1):
                off = dy * W + dx                          # flat-pixel shift of this tap
                if off > 0:
                    sh = jnp.concatenate(
                        [y1m[:, off:], jnp.zeros((c_mid, off), f32)], axis=1)
                elif off < 0:
                    sh = jnp.concatenate(
                        [jnp.zeros((c_mid, -off), f32), y1m[:, :HW + off]], axis=1)
                else:
                    sh = y1m
                if dx == -1:                               # zero row-wrap reads
                    sh = sh * mask_l
                elif dx == 1:
                    sh = sh * mask_r
                taps.append(sh)
        patch2 = jnp.concatenate(taps, axis=0).astype(bf16)               # (KK*c_mid, HW)
        acc2 = jnp.dot(w2t_ref[...], patch2, preferred_element_type=f32)  # (c_mid, HW)
        y2 = _lrelu(acc2 * seg("si2") + n2 + seg("b2"))

        # ---------------- ToRGB (1x1 modulated conv, no demodulation) --------------
        y2m = (y2 * seg("s3")).astype(bf16)
        rgb = jnp.dot(w3t_ref[...], y2m, preferred_element_type=f32)      # (c_rgb, HW)
        rgb = _lrelu(rgb + seg("b3"))

        x_out_ref[0] = y2
        rgb_ref[0] = rgb

    return kernel


# ----------------------------------------------------------------------------
# GeneratorBlock forward: one pallas_call, grid over batch (parallel).
# ----------------------------------------------------------------------------
def generator_block(params, x_nchw, w, noise):
    p1, p2, pr = params["sb1"], params["sb2"], params["rgb"]
    B, c_in, H, W = x_nchw.shape
    K = p1["conv_w"].shape[0]
    c_mid = p1["conv_w"].shape[-1]
    c_rgb = pr["conv_w"].shape[-1]
    KK, HW = K * K, H * W
    KKC1 = KK * c_in
    pad = (K - 1) // 2
    f32, bf16 = jnp.float32, jnp.bfloat16

    # ---- layer-1 im2col in XLA (independent of anything computed in-kernel) -------
    x_pad = jnp.pad(x_nchw.astype(f32), ((0, 0), (0, 0), (pad, pad), (pad, pad)))
    patches1 = jnp.concatenate(
        [x_pad[:, :, ky:ky + H, kx:kx + W].reshape(B, c_in, HW)
         for ky in range(K) for kx in range(K)], axis=1)        # (B, KK*c_in, HW)

    # ---- batch style vectors + demodulation factors (tiny XLA matmuls, once) ------
    s1 = w.astype(f32) @ p1["style_w"] + p1["style_b"][None, :]             # (B, c_in)
    s2 = w.astype(f32) @ p2["style_w"] + p2["style_b"][None, :]             # (B, c_mid)
    s3 = w.astype(f32) @ pr["style_w"] + pr["style_b"][None, :]             # (B, c_mid)
    wsq1 = jnp.sum(p1["conv_w"].astype(f32) ** 2, axis=(0, 1))              # (c_in, c_mid)
    wsq2 = jnp.sum(p2["conv_w"].astype(f32) ** 2, axis=(0, 1))              # (c_mid, c_mid)
    si1 = jax.lax.rsqrt((s1 * s1) @ wsq1 + _EPS)                            # (B, c_mid)
    si2 = jax.lax.rsqrt((s2 * s2) @ wsq2 + _EPS)

    # ---- pack all per-batch column operands into ONE (B, ncol, 1) input -----------
    offs, ncol = _col_layout(KKC1, c_mid, c_rgb)
    segs = {
        "s1t": jnp.tile(s1, (1, KK)),                       # index t*c_in + c -> s1[c]
        "si1": si1, "s2": s2, "si2": si2, "s3": s3,
        "b1": jnp.broadcast_to(p1["bias"][None, :].astype(f32), (B, c_mid)),
        "b2": jnp.broadcast_to(p2["bias"][None, :].astype(f32), (B, c_mid)),
        "b3": jnp.broadcast_to(pr["bias"][None, :].astype(f32), (B, c_rgb)),
    }
    colp = jnp.zeros((B, ncol), f32)
    for name, (off, ln) in offs.items():
        colp = colp.at[:, off:off + ln].set(segs[name].astype(f32))
    colp = colp[..., None]                                  # (B, ncol, 1)

    # ---- lane-dense noise (scale_noise folded in), both layers in one input -------
    def _nz(n, scale):
        if n is None:
            return jnp.zeros((B, 1, HW), f32)
        return (scale * n.astype(f32)).reshape(B, 1, HW)
    nz = jnp.concatenate([_nz(noise[0], p1["scale_noise"]),
                          _nz(noise[1], p2["scale_noise"])], axis=1)        # (B, 2, HW)

    # ---- column-boundary masks for the in-kernel tap shifts (batch-invariant) -----
    col_idx = jnp.arange(HW, dtype=jnp.int32) % W
    masks = jnp.stack([(col_idx != 0), (col_idx != W - 1)]).astype(f32)     # (2, HW)

    # ---- conv weights as (c_out, K*K*c_in) bf16 matrices (resident) ---------------
    w1t = p1["conv_w"].reshape(KKC1, c_mid).T.astype(bf16)          # (c_mid, KK*c_in)
    w2t = p2["conv_w"].reshape(KK * c_mid, c_mid).T.astype(bf16)    # (c_mid, KK*c_mid)
    w3t = pr["conv_w"].reshape(c_mid, c_rgb).T.astype(bf16)         # (c_rgb, c_mid)

    kernel = _make_fused_kernel(H, W, K, c_in, c_mid, c_rgb)
    x_out, rgb = pl.pallas_call(
        kernel,
        out_shape=(jax.ShapeDtypeStruct((B, c_mid, HW), f32),
                   jax.ShapeDtypeStruct((B, c_rgb, HW), f32)),
        grid=(B,),
        in_specs=[
            pl.BlockSpec((1, KKC1, HW), lambda b: (b, 0, 0)),        # layer-1 im2col patches
            pl.BlockSpec((1, ncol, 1), lambda b: (b, 0, 0)),         # packed styles/demod/bias
            pl.BlockSpec((1, 2, HW), lambda b: (b, 0, 0)),           # scaled noise (both layers)
            pl.BlockSpec((2, HW), lambda b: (0, 0)),                 # column masks (resident)
            pl.BlockSpec((c_mid, KKC1), lambda b: (0, 0)),           # conv1 weights (resident)
            pl.BlockSpec((c_mid, KK * c_mid), lambda b: (0, 0)),     # conv2 weights (resident)
            pl.BlockSpec((c_rgb, c_mid), lambda b: (0, 0)),          # to_rgb weights (resident)
        ],
        out_specs=(pl.BlockSpec((1, c_mid, HW), lambda b: (b, 0, 0)),
                   pl.BlockSpec((1, c_rgb, HW), lambda b: (b, 0, 0))),
        compiler_params=pltpu.CompilerParams(dimension_semantics=("parallel",)),
    )(patches1, colp, nz, masks, w1t, w2t, w3t)

    # pixel-minor outputs -> NCHW is a free reshape (no transpose, no extra HBM pass)
    return x_out.reshape(B, c_mid, H, W), rgb.reshape(B, c_rgb, H, W)


# ----------------------------------------------------------------------------
# Pure-JAX reference (same math incl. bf16 conv operands) for correctness check.
# ----------------------------------------------------------------------------
def _ref_generator_block(params, x_nchw, w, noise):
    f32, bf16 = jnp.float32, jnp.bfloat16

    def styled_conv(x_nhwc, p, noise_nhwc, demodulate):
        s = w.astype(f32) @ p["style_w"] + p["style_b"][None, :]
        xs = x_nhwc * s[:, None, None, :]
        y = jax.lax.conv_general_dilated(
            xs.astype(bf16), p["conv_w"].astype(bf16),
            window_strides=(1, 1), padding="SAME",
            dimension_numbers=("NHWC", "HWIO", "NHWC"),
            preferred_element_type=f32)
        if demodulate:
            wsq = jnp.sum(p["conv_w"].astype(f32) ** 2, axis=(0, 1))
            y = y * jax.lax.rsqrt((s * s) @ wsq + _EPS)[:, None, None, :]
        if noise_nhwc is not None:
            y = y + p["scale_noise"] * noise_nhwc
        y = y + p["bias"][None, None, None, :]
        return jnp.where(y >= 0.0, y, _SLOPE * y)

    x = jnp.transpose(x_nchw, (0, 2, 3, 1)).astype(f32)
    n0 = None if noise[0] is None else jnp.transpose(noise[0], (0, 2, 3, 1)).astype(f32)
    n1 = None if noise[1] is None else jnp.transpose(noise[1], (0, 2, 3, 1)).astype(f32)
    x = styled_conv(x, params["sb1"], n0, True)
    x = styled_conv(x, params["sb2"], n1, True)
    rgb = styled_conv(x, params["rgb"], None, False)
    return jnp.transpose(x, (0, 3, 1, 2)), jnp.transpose(rgb, (0, 3, 1, 2))


# ----------------------------------------------------------------------------
# Deterministic parameter init (shapes per the PyTorch __init__; weights use the
# EqualizedWeight scaling c = 1/sqrt(fan_in)).
# ----------------------------------------------------------------------------
def init_params(key, d_latent, in_f, out_f):
    ks = jax.random.split(key, 11)

    def eq_linear_w(k, din, dout):       # EqualizedWeight([dout, din]), stored transposed
        return jax.random.normal(k, (din, dout), jnp.float32) / jnp.sqrt(float(din))

    def eq_conv_w(k, K, cin, cout):      # EqualizedWeight([cout, cin, K, K]) as HWIO
        return jax.random.normal(k, (K, K, cin, cout), jnp.float32) / jnp.sqrt(float(cin * K * K))

    return {
        "sb1": dict(style_w=eq_linear_w(ks[0], d_latent, in_f),
                    style_b=jnp.ones((in_f,), jnp.float32),      # EqualizedLinear(bias=1.0)
                    conv_w=eq_conv_w(ks[1], 3, in_f, out_f),
                    scale_noise=0.1 * jax.random.normal(ks[2], (), jnp.float32),
                    bias=0.1 * jax.random.normal(ks[3], (out_f,), jnp.float32)),
        "sb2": dict(style_w=eq_linear_w(ks[4], d_latent, out_f),
                    style_b=jnp.ones((out_f,), jnp.float32),
                    conv_w=eq_conv_w(ks[5], 3, out_f, out_f),
                    scale_noise=0.1 * jax.random.normal(ks[6], (), jnp.float32),
                    bias=0.1 * jax.random.normal(ks[7], (out_f,), jnp.float32)),
        "rgb": dict(style_w=eq_linear_w(ks[8], d_latent, out_f),
                    style_b=jnp.ones((out_f,), jnp.float32),
                    conv_w=eq_conv_w(ks[9], 1, out_f, 3),
                    bias=0.1 * jax.random.normal(ks[10], (3,), jnp.float32)),
    }


if __name__ == "__main__":
    B, d_latent, in_f, out_f, H, W = 2, 32, 4, 8, 16, 16
    key = jax.random.PRNGKey(0)
    k_par, kx, kw, kn0, kn1 = jax.random.split(key, 5)

    params = init_params(k_par, d_latent, in_f, out_f)
    x = jax.random.normal(kx, (B, in_f, H, W), jnp.float32)     # [batch, in_features, H, W]
    w = jax.random.normal(kw, (B, d_latent), jnp.float32)       # [batch, d_latent]
    noise = (jax.random.normal(kn0, (B, 1, H, W), jnp.float32),
             jax.random.normal(kn1, (B, 1, H, W), jnp.float32))

    x_out, rgb = generator_block(params, x, w, noise)
    jax.block_until_ready((x_out, rgb))

    # correctness check against a pure-JAX reference of the same math
    x_ref, rgb_ref = _ref_generator_block(params, x, w, noise)
    err_x = float(jnp.max(jnp.abs(x_out - x_ref)))
    err_rgb = float(jnp.max(jnp.abs(rgb - rgb_ref)))
    assert x_out.shape == (B, out_f, H, W), x_out.shape
    assert rgb.shape == (B, 3, H, W), rgb.shape
    assert err_x < 3e-2 and err_rgb < 3e-2, (err_x, err_rgb)

    print("KERNEL_OK")
</pallas_src>

<mosaic_0001>
module attributes {stable_mosaic.version = 11 : i64} {
  func.func @kernel(%arg0: i32, %arg1: memref<1x36x256xf32, #tpu.memory_space<vmem>>, %arg2: memref<1x96x1xf32, #tpu.memory_space<vmem>>, %arg3: memref<1x2x256xf32, #tpu.memory_space<vmem>>, %arg4: memref<2x256xf32, #tpu.memory_space<vmem>>, %arg5: memref<8x36xbf16, #tpu.memory_space<vmem>>, %arg6: memref<8x72xbf16, #tpu.memory_space<vmem>>, %arg7: memref<3x8xbf16, #tpu.memory_space<vmem>>, %arg8: memref<1x8x256xf32, #tpu.memory_space<vmem>>, %arg9: memref<1x3x256xf32, #tpu.memory_space<vmem>>) attributes {dimension_semantics = [#tpu.dimension_semantics<parallel>], iteration_bounds = array<i64: 2>, scalar_prefetch = 0 : i64, scratch_operands = 0 : i64, tpu.core_type = #tpu.core_type<tc>, window_params = [{transform_indices = @transform_0, window_bounds = array<i64: 1, 36, 256>}, {transform_indices = @transform_1, window_bounds = array<i64: 1, 96, 1>}, {transform_indices = @transform_2, window_bounds = array<i64: 1, 2, 256>}, {pipeline_mode = #tpu.pipeline_mode<synchronous>, transform_indices = @transform_3, window_bounds = array<i64: 2, 256>}, {pipeline_mode = #tpu.pipeline_mode<synchronous>, transform_indices = @transform_4, window_bounds = array<i64: 8, 36>}, {pipeline_mode = #tpu.pipeline_mode<synchronous>, transform_indices = @transform_5, window_bounds = array<i64: 8, 72>}, {pipeline_mode = #tpu.pipeline_mode<synchronous>, transform_indices = @transform_6, window_bounds = array<i64: 3, 8>}, {transform_indices = @transform_7, window_bounds = array<i64: 1, 8, 256>}, {transform_indices = @transform_8, window_bounds = array<i64: 1, 3, 256>}]} {
    %c0 = arith.constant 0 : index
    %c0_0 = arith.constant 0 : index
    %c0_1 = arith.constant 0 : index
    %0 = vector.load %arg2[%c0, %c0_0, %c0_1] : memref<1x96x1xf32, #tpu.memory_space<vmem>>, vector<1x96x1xf32>
    %1 = vector.shape_cast %0 : vector<1x96x1xf32> to vector<96x1xf32>
    %c0_2 = arith.constant 0 : index
    %c0_3 = arith.constant 0 : index
    %c0_4 = arith.constant 0 : index
    %2 = vector.load %arg3[%c0_2, %c0_3, %c0_4] : memref<1x2x256xf32, #tpu.memory_space<vmem>>, vector<1x2x256xf32>
    %3 = vector.shape_cast %2 : vector<1x2x256xf32> to vector<2x256xf32>
    %4 = vector.extract_strided_slice %3 {offsets = [0, 0], sizes = [1, 256], strides = [1, 1]} : vector<2x256xf32> to vector<1x256xf32>
    %5 = vector.extract_strided_slice %3 {offsets = [1, 0], sizes = [1, 256], strides = [1, 1]} : vector<2x256xf32> to vector<1x256xf32>
    %c0_5 = arith.constant 0 : index
    %c0_6 = arith.constant 0 : index
    %6 = vector.load %arg4[%c0_5, %c0_6] : memref<2x256xf32, #tpu.memory_space<vmem>>, vector<2x256xf32>
    %7 = vector.extract_strided_slice %6 {offsets = [0, 0], sizes = [1, 256], strides = [1, 1]} : vector<2x256xf32> to vector<1x256xf32>
    %8 = vector.extract_strided_slice %6 {offsets = [1, 0], sizes = [1, 256], strides = [1, 1]} : vector<2x256xf32> to vector<1x256xf32>
    %c0_7 = arith.constant 0 : index
    %c0_8 = arith.constant 0 : index
    %c0_9 = arith.constant 0 : index
    %9 = vector.load %arg1[%c0_7, %c0_8, %c0_9] : memref<1x36x256xf32, #tpu.memory_space<vmem>>, vector<1x36x256xf32>
    %10 = vector.shape_cast %9 : vector<1x36x256xf32> to vector<36x256xf32>
    %11 = vector.extract_strided_slice %1 {offsets = [0, 0], sizes = [36, 1], strides = [1, 1]} : vector<96x1xf32> to vector<36x1xf32>
    %12 = vector.broadcast %11 : vector<36x1xf32> to vector<36x256xf32>
    %13 = arith.mulf %10, %12 : vector<36x256xf32>
    %14 = arith.truncf %13 : vector<36x256xf32> to vector<36x256xbf16>
    %c0_10 = arith.constant 0 : index
    %c0_11 = arith.constant 0 : index
    %15 = vector.load %arg5[%c0_10, %c0_11] : memref<8x36xbf16, #tpu.memory_space<vmem>>, vector<8x36xbf16>
    %cst = arith.constant dense<0.000000e+00> : vector<8x256xf32>
    %16 = tpu.matmul %15, %14, %cst {dimension_numbers = #tpu.dot_dimension_numbers<[1], [0], [0], [1], [0, 0, 1, 1], [], []>} : vector<8x36xbf16>, vector<36x256xbf16>, vector<8x256xf32> -> vector<8x256xf32>
    %17 = vector.extract_strided_slice %1 {offsets = [40, 0], sizes = [8, 1], strides = [1, 1]} : vector<96x1xf32> to vector<8x1xf32>
    %18 = vector.broadcast %17 : vector<8x1xf32> to vector<8x256xf32>
    %19 = arith.mulf %16, %18 : vector<8x256xf32>
    %20 = vector.broadcast %4 : vector<1x256xf32> to vector<8x256xf32>
    %21 = arith.addf %19, %20 : vector<8x256xf32>
    %22 = vector.extract_strided_slice %1 {offsets = [72, 0], sizes = [8, 1], strides = [1, 1]} : vector<96x1xf32> to vector<8x1xf32>
    %23 = vector.broadcast %22 : vector<8x1xf32> to vector<8x256xf32>
    %24 = arith.addf %21, %23 : vector<8x256xf32>
    %cst_12 = arith.constant 0.000000e+00 : f32
    %25 = vector.broadcast %cst_12 : f32 to vector<8x256xf32>
    %26 = arith.cmpf oge, %24, %25 : vector<8x256xf32>
    %cst_13 = arith.constant 2.000000e-01 : f32
    %27 = vector.broadcast %cst_13 : f32 to vector<8x256xf32>
    %28 = arith.mulf %27, %24 : vector<8x256xf32>
    %29 = arith.select %26, %24, %28 : vector<8x256xi1>, vector<8x256xf32>
    %30 = vector.extract_strided_slice %1 {offsets = [48, 0], sizes = [8, 1], strides = [1, 1]} : vector<96x1xf32> to vector<8x1xf32>
    %31 = vector.broadcast %30 : vector<8x1xf32> to vector<8x256xf32>
    %32 = arith.mulf %29, %31 : vector<8x256xf32>
    %cst_14 = arith.constant 0.000000e+00 : f32
    %33 = vector.broadcast %cst_14 : f32 to vector<8x17xf32>
    %34 = vector.extract_strided_slice %32 {offsets = [0, 0], sizes = [8, 239], strides = [1, 1]} : vector<8x256xf32> to vector<8x239xf32>
    %35 = tpu.concatenate %33, %34 in 1 : vector<8x17xf32>, vector<8x239xf32> -> vector<8x256xf32>
    %36 = vector.broadcast %7 : vector<1x256xf32> to vector<8x256xf32>
    %37 = arith.mulf %35, %36 : vector<8x256xf32>
    %cst_15 = arith.constant 0.000000e+00 : f32
    %38 = vector.broadcast %cst_15 : f32 to vector<8x16xf32>
    %39 = vector.extract_strided_slice %32 {offsets = [0, 0], sizes = [8, 240], strides = [1, 1]} : vector<8x256xf32> to vector<8x240xf32>
    %40 = tpu.concatenate %38, %39 in 1 : vector<8x16xf32>, vector<8x240xf32> -> vector<8x256xf32>
    %cst_16 = arith.constant 0.000000e+00 : f32
    %41 = vector.broadcast %cst_16 : f32 to vector<8x15xf32>
    %42 = vector.extract_strided_slice %32 {offsets = [0, 0], sizes = [8, 241], strides = [1, 1]} : vector<8x256xf32> to vector<8x241xf32>
    %43 = tpu.concatenate %41, %42 in 1 : vector<8x15xf32>, vector<8x241xf32> -> vector<8x256xf32>
    %44 = vector.broadcast %8 : vector<1x256xf32> to vector<8x256xf32>
    %45 = arith.mulf %43, %44 : vector<8x256xf32>
    %cst_17 = arith.constant 0.000000e+00 : f32
    %46 = vector.broadcast %cst_17 : f32 to vector<8x1xf32>
    %47 = vector.extract_strided_slice %32 {offsets = [0, 0], sizes = [8, 255], strides = [1, 1]} : vector<8x256xf32> to vector<8x255xf32>
    %48 = tpu.concatenate %46, %47 in 1 : vector<8x1xf32>, vector<8x255xf32> -> vector<8x256xf32>
    %49 = vector.broadcast %7 : vector<1x256xf32> to vector<8x256xf32>
    %50 = arith.mulf %48, %49 : vector<8x256xf32>
    %51 = vector.extract_strided_slice %32 {offsets = [0, 1], sizes = [8, 255], strides = [1, 1]} : vector<8x256xf32> to vector<8x255xf32>
    %cst_18 = arith.constant 0.000000e+00 : f32
    %52 = vector.broadcast %cst_18 : f32 to vector<8x1xf32>
    %53 = tpu.concatenate %51, %52 in 1 : vector<8x255xf32>, vector<8x1xf32> -> vector<8x256xf32>
    %54 = vector.broadcast %8 : vector<1x256xf32> to vector<8x256xf32>
    %55 = arith.mulf %53, %54 : vector<8x256xf32>
    %56 = vector.extract_strided_slice %32 {offsets = [0, 15], sizes = [8, 241], strides = [1, 1]} : vector<8x256xf32> to vector<8x241xf32>
    %cst_19 = arith.constant 0.000000e+00 : f32
    %57 = vector.broadcast %cst_19 : f32 to vector<8x15xf32>
    %58 = tpu.concatenate %56, %57 in 1 : vector<8x241xf32>, vector<8x15xf32> -> vector<8x256xf32>
    %59 = vector.broadcast %7 : vector<1x256xf32> to vector<8x256xf32>
    %60 = arith.mulf %58, %59 : vector<8x256xf32>
    %61 = vector.extract_strided_slice %32 {offsets = [0, 16], sizes = [8, 240], strides = [1, 1]} : vector<8x256xf32> to vector<8x240xf32>
    %cst_20 = arith.constant 0.000000e+00 : f32
    %62 = vector.broadcast %cst_20 : f32 to vector<8x16xf32>
    %63 = tpu.concatenate %61, %62 in 1 : vector<8x240xf32>, vector<8x16xf32> -> vector<8x256xf32>
    %64 = vector.extract_strided_slice %32 {offsets = [0, 17], sizes = [8, 239], strides = [1, 1]} : vector<8x256xf32> to vector<8x239xf32>
    %cst_21 = arith.constant 0.000000e+00 : f32
    %65 = vector.broadcast %cst_21 : f32 to vector<8x17xf32>
    %66 = tpu.concatenate %64, %65 in 1 : vector<8x239xf32>, vector<8x17xf32> -> vector<8x256xf32>
    %67 = vector.broadcast %8 : vector<1x256xf32> to vector<8x256xf32>
    %68 = arith.mulf %66, %67 : vector<8x256xf32>
    %69 = tpu.concatenate %37, %40, %45, %50, %32, %55, %60, %63, %68 in 0 : vector<8x256xf32>, vector<8x256xf32>, vector<8x256xf32>, vector<8x256xf32>, vector<8x256xf32>, vector<8x256xf32>, vector<8x256xf32>, vector<8x256xf32>, vector<8x256xf32> -> vector<72x256xf32>
    %70 = arith.truncf %69 : vector<72x256xf32> to vector<72x256xbf16>
    %c0_22 = arith.constant 0 : index
    %c0_23 = arith.constant 0 : index
    %71 = vector.load %arg6[%c0_22, %c0_23] : memref<8x72xbf16, #tpu.memory_space<vmem>>, vector<8x72xbf16>
    %cst_24 = arith.constant dense<0.000000e+00> : vector<8x256xf32>
    %72 = tpu.matmul %71, %70, %cst_24 {dimension_numbers = #tpu.dot_dimension_numbers<[1], [0], [0], [1], [0, 0, 1, 1], [], []>} : vector<8x72xbf16>, vector<72x256xbf16>, vector<8x256xf32> -> vector<8x256xf32>
    %73 = vector.extract_strided_slice %1 {offsets = [56, 0], sizes = [8, 1], strides = [1, 1]} : vector<96x1xf32> to vector<8x1xf32>
    %74 = vector.broadcast %73 : vector<8x1xf32> to vector<8x256xf32>
    %75 = arith.mulf %72, %74 : vector<8x256xf32>
    %76 = vector.broadcast %5 : vector<1x256xf32> to vector<8x256xf32>
    %77 = arith.addf %75, %76 : vector<8x256xf32>
    %78 = vector.extract_strided_slice %1 {offsets = [80, 0], sizes = [8, 1], strides = [1, 1]} : vector<96x1xf32> to vector<8x1xf32>
    %79 = vector.broadcast %78 : vector<8x1xf32> to vector<8x256xf32>
    %80 = arith.addf %77, %79 : vector<8x256xf32>
    %cst_25 = arith.constant 0.000000e+00 : f32
    %81 = vector.broadcast %cst_25 : f32 to vector<8x256xf32>
    %82 = arith.cmpf oge, %80, %81 : vector<8x256xf32>
    %cst_26 = arith.constant 2.000000e-01 : f32
    %83 = vector.broadcast %cst_26 : f32 to vector<8x256xf32>
    %84 = arith.mulf %83, %80 : vector<8x256xf32>
    %85 = arith.select %82, %80, %84 : vector<8x256xi1>, vector<8x256xf32>
    %86 = vector.extract_strided_slice %1 {offsets = [64, 0], sizes = [8, 1], strides = [1, 1]} : vector<96x1xf32> to vector<8x1xf32>
    %87 = vector.broadcast %86 : vector<8x1xf32> to vector<8x256xf32>
    %88 = arith.mulf %85, %87 : vector<8x256xf32>
    %89 = arith.truncf %88 : vector<8x256xf32> to vector<8x256xbf16>
    %c0_27 = arith.constant 0 : index
    %c0_28 = arith.constant 0 : index
    %90 = vector.load %arg7[%c0_27, %c0_28] : memref<3x8xbf16, #tpu.memory_space<vmem>>, vector<3x8xbf16>
    %cst_29 = arith.constant dense<0.000000e+00> : vector<3x256xf32>
    %91 = tpu.matmul %90, %89, %cst_29 {dimension_numbers = #tpu.dot_dimension_numbers<[1], [0], [0], [1], [0, 0, 1, 1], [], []>} : vector<3x8xbf16>, vector<8x256xbf16>, vector<3x256xf32> -> vector<3x256xf32>
    %92 = vector.extract_strided_slice %1 {offsets = [88, 0], sizes = [3, 1], strides = [1, 1]} : vector<96x1xf32> to vector<3x1xf32>
    %93 = vector.broadcast %92 : vector<3x1xf32> to vector<3x256xf32>
    %94 = arith.addf %91, %93 : vector<3x256xf32>
    %cst_30 = arith.constant 0.000000e+00 : f32
    %95 = vector.broadcast %cst_30 : f32 to vector<3x256xf32>
    %96 = arith.cmpf oge, %94, %95 : vector<3x256xf32>
    %cst_31 = arith.constant 2.000000e-01 : f32
    %97 = vector.broadcast %cst_31 : f32 to vector<3x256xf32>
    %98 = arith.mulf %97, %94 : vector<3x256xf32>
    %99 = arith.select %96, %94, %98 : vector<3x256xi1>, vector<3x256xf32>
    %c0_32 = arith.constant 0 : index
    %c0_33 = arith.constant 0 : index
    %c0_34 = arith.constant 0 : index
    %100 = vector.load %arg8[%c0_32, %c0_33, %c0_34] : memref<1x8x256xf32, #tpu.memory_space<vmem>>, vector<1x8x256xf32>
    %101 = vector.shape_cast %100 : vector<1x8x256xf32> to vector<8x256xf32>
    %102 = vector.shape_cast %85 : vector<8x256xf32> to vector<1x8x256xf32>
    tpu.vector_store %arg8[%c0_32, %c0_33, %c0_34], %102 {strides = array<i32>} : memref<1x8x256xf32, #tpu.memory_space<vmem>>, vector<1x8x256xf32>,
    %c0_35 = arith.constant 0 : index
    %c0_36 = arith.constant 0 : index
    %c0_37 = arith.constant 0 : index
    %103 = vector.load %arg9[%c0_35, %c0_36, %c0_37] : memref<1x3x256xf32, #tpu.memory_space<vmem>>, vector<1x3x256xf32>
    %104 = vector.shape_cast %103 : vector<1x3x256xf32> to vector<3x256xf32>
    %105 = vector.shape_cast %99 : vector<3x256xf32> to vector<1x3x256xf32>
    tpu.vector_store %arg9[%c0_35, %c0_36, %c0_37], %105 {strides = array<i32>} : memref<1x3x256xf32, #tpu.memory_space<vmem>>, vector<1x3x256xf32>,
    return
  }
  func.func @transform_0(%arg0: i32) -> (i32, i32, i32) {
    %c0_i32 = arith.constant 0 : i32
    %c0_i32_0 = arith.constant 0 : i32
    %c0_i32_1 = arith.constant 0 : i32
    return %arg0, %c0_i32, %c0_i32_0 : i32, i32, i32
  }
  func.func @transform_1(%arg0: i32) -> (i32, i32, i32) {
    %c0_i32 = arith.constant 0 : i32
    %c0_i32_0 = arith.constant 0 : i32
    %c0_i32_1 = arith.constant 0 : i32
    return %arg0, %c0_i32, %c0_i32_0 : i32, i32, i32
  }
  func.func @transform_2(%arg0: i32) -> (i32, i32, i32) {
    %c0_i32 = arith.constant 0 : i32
    %c0_i32_0 = arith.constant 0 : i32
    %c0_i32_1 = arith.constant 0 : i32
    return %arg0, %c0_i32, %c0_i32_0 : i32, i32, i32
  }
  func.func @transform_3(%arg0: i32) -> (i32, i32) {
    %c0_i32 = arith.constant 0 : i32
    %c0_i32_0 = arith.constant 0 : i32
    %c0_i32_1 = arith.constant 0 : i32
    return %c0_i32, %c0_i32_0 : i32, i32
  }
  func.func @transform_4(%arg0: i32) -> (i32, i32) {
    %c0_i32 = arith.constant 0 : i32
    %c0_i32_0 = arith.constant 0 : i32
    %c0_i32_1 = arith.constant 0 : i32
    return %c0_i32, %c0_i32_0 : i32, i32
  }
  func.func @transform_5(%arg0: i32) -> (i32, i32) {
    %c0_i32 = arith.constant 0 : i32
    %c0_i32_0 = arith.constant 0 : i32
    %c0_i32_1 = arith.constant 0 : i32
    return %c0_i32, %c0_i32_0 : i32, i32
  }
  func.func @transform_6(%arg0: i32) -> (i32, i32) {
    %c0_i32 = arith.constant 0 : i32
    %c0_i32_0 = arith.constant 0 : i32
    %c0_i32_1 = arith.constant 0 : i32
    return %c0_i32, %c0_i32_0 : i32, i32
  }
  func.func @transform_7(%arg0: i32) -> (i32, i32, i32) {
    %c0_i32 = arith.constant 0 : i32
    %c0_i32_0 = arith.constant 0 : i32
    %c0_i32_1 = arith.constant 0 : i32
    return %arg0, %c0_i32, %c0_i32_0 : i32, i32, i32
  }
  func.func @transform_8(%arg0: i32) -> (i32, i32, i32) {
    %c0_i32 = arith.constant 0 : i32
    %c0_i32_0 = arith.constant 0 : i32
    %c0_i32_1 = arith.constant 0 : i32
    return %arg0, %c0_i32, %c0_i32_0 : i32, i32, i32
  }
}

</mosaic_0001>

<llo_original>
// kernel: tpu_custom_call.1
$region0: #{tpu_custom_call.1}
  #allocation0 [shape = 'u32[]', space=smem, size = 0x4, offset = 0x4, fixed_abs, tag = 'smem constant byte address 0x4 - core index']
  #allocation1 [shape = 'u32[144,128]{1,0:T(1,128)}', space=vmem, size = 0x12000, scoped, tag = 'internal scratch']
  %s0 = inlined_call_operand.vmem [shape: f32[2,36,256], index: 0, kind: input, shape index: {}]
  %s1 = inlined_call_operand.vmem [shape: f32[2,96,1], index: 1, kind: input, shape index: {}]
  %s2 = inlined_call_operand.vmem [shape: f32[2,2,256], index: 2, kind: input, shape index: {}]
  %s3 = inlined_call_operand.vmem [shape: f32[2,256], index: 3, kind: input, shape index: {}]
  %s4 = inlined_call_operand.vmem [shape: bf16[8,36], index: 4, kind: input, shape index: {}]
  %s5 = inlined_call_operand.vmem [shape: bf16[8,72], index: 5, kind: input, shape index: {}]
  %s6 = inlined_call_operand.vmem [shape: bf16[3,8], index: 6, kind: input, shape index: {}]
  %s7 = inlined_call_operand.hbm [shape: f32[2,8,256], index: 7, kind: output, shape index: {0}]
  %s8 = inlined_call_operand.vmem [shape: f32[2,3,256], index: 8, kind: output, shape index: {1}]
  %9 = xla_tuple %s7, %s8
  %s10 = sld [smem:[#allocation0]]
  $region69: #{tpu_custom_call.1} parent=0
    _
  %s12 = ssub.s32 1, %s10
  %s13 = scalar_select 0, %s12, %s10
  $region1: #{tpu_custom_call.1} parent=0
    #allocation2 [shape = 'u8[16384]{0}', space=vmem, size = 0x4000, scoped, tag = 'output window, operand 0']
    #allocation3 [shape = 's32[2]{0}', space=sflag, size = 0x8, scoped, tag = 'scoped memory for tpu_custom_call.1']
    %14 = vsyncpa [#allocation3], 0
    %s15 = scalar_lea.sflag [#allocation3], 1
    %16 = vsyncpa %s15, 0
    loop: start=0, step=1, limit=4
    $region2: #{tpu_custom_call.1} parent=1 // loop_pre_header
      _
    $region3: #{tpu_custom_call.1} parent=1 // loop_header
      %s18 = sphi 0, %s22
      %p19 = scmp.ge.s32.totalorder %s18, 4
      %s28 = sphi 0, %s30
      %s31 = sphi 0, %s28
      %s32 = sphi 0, %s31
      %s48 = sphi 0, %s32
      %s54 = sphi 0, %s56
      %s57 = sphi 0, %s54
      %s58 = sphi 0, %s57
      %s74 = sphi 0, %s58
      %s80 = sphi 0, %s82
      %s83 = sphi 0, %s80
      %s84 = sphi 0, %s83
      %s100 = sphi 0, %s84
      %s104 = sphi 0, %s104
      %s106 = sphi 0, %s104
      %s107 = sphi 0, %s106
      %s121 = sphi 0, %s107
      %s125 = sphi 0, %s125
      %s127 = sphi 0, %s125
      %s128 = sphi 0, %s127
      %s142 = sphi 0, %s128
      %s146 = sphi 0, %s146
      %s148 = sphi 0, %s146
      %s149 = sphi 0, %s148
      %s163 = sphi 0, %s149
      %s167 = sphi 0, %s167
      %s169 = sphi 0, %s167
      %s170 = sphi 0, %s169
      %s184 = sphi 0, %s170
      %s190 = sphi 0, %s192
      %s193 = sphi 0, %s190
      %s194 = sphi 0, %s193
      %s210 = sphi 0, %s194
      %s216 = sphi 0, %s218
      %s219 = sphi 0, %s216
      %s220 = sphi 0, %s219
      %s236 = sphi 0, %s220
    $region4: #{tpu_custom_call.1} parent=1 // loop_header_branch
      %21 = sbr.rel (%p19) target = $region8
    $region5: #{tpu_custom_call.1} parent=1 // loop_body
      %s23 = ssub.s32 %s18, 1
      %s24 = ssub.s32 %s18, 2
      %s25 = sadd.s32 %s18, 1
      %s26 = ssub.s32 %s18, %s25
      %p27 = scmp.eq.s32.totalorder %s26, 0
      %s29 = sadd.s32 %s28, 1
      %s30 = scalar_select %p27, %s28, %s29
      %p33 = pneg %p27
      %p34 = scmp.eq.s32.totalorder %s18, 1
      %p35 = por %p33, %p34
      %p36 = scmp.ne.s32.totalorder %s28, %s31
      %p37 = scmp.eq.s32.totalorder %s18, 0
      %p38 = por %p36, %p37
      %p39 = scmp.ne.s32.totalorder %s28, %s31
      %p40 = scmp.eq.s32.totalorder %s23, 1
      %p41 = por %p39, %p40
      %p42 = scmp.ne.s32.totalorder %s31, %s32
      %p43 = scmp.eq.s32.totalorder %s23, 0
      %p44 = por %p42, %p43
      %p45 = scmp.ne.s32.totalorder %s31, %s32
      %p46 = scmp.eq.s32.totalorder %s24, 1
      %p47 = por %p45, %p46
      %p49 = scmp.ne.s32.totalorder %s32, %s48
      %p50 = scmp.eq.s32.totalorder %s24, 0
      %p51 = por %p49, %p50
      %s52 = ssub.s32 %s18, %s25
      %p53 = scmp.eq.s32.totalorder %s52, 0
      %s55 = sadd.s32 %s54, 1
      %s56 = scalar_select %p53, %s54, %s55
      %p59 = pneg %p53
      %p60 = scmp.eq.s32.totalorder %s18, 1
      %p61 = por %p59, %p60
      %p62 = scmp.ne.s32.totalorder %s54, %s57
      %p63 = scmp.eq.s32.totalorder %s18, 0
      %p64 = por %p62, %p63
      %p65 = scmp.ne.s32.totalorder %s54, %s57
      %p66 = scmp.eq.s32.totalorder %s23, 1
      %p67 = por %p65, %p66
      %p68 = scmp.ne.s32.totalorder %s57, %s58
      %p69 = scmp.eq.s32.totalorder %s23, 0
      %p70 = por %p68, %p69
      %p71 = scmp.ne.s32.totalorder %s57, %s58
      %p72 = scmp.eq.s32.totalorder %s24, 1
      %p73 = por %p71, %p72
      %p75 = scmp.ne.s32.totalorder %s58, %s74
      %p76 = scmp.eq.s32.totalorder %s24, 0
      %p77 = por %p75, %p76
      %s78 = ssub.s32 %s18, %s25
      %p79 = scmp.eq.s32.totalorder %s78, 0
      %s81 = sadd.s32 %s80, 1
      %s82 = scalar_select %p79, %s80, %s81
      %p85 = pneg %p79
      %p86 = scmp.eq.s32.totalorder %s18, 1
      %p87 = por %p85, %p86
      %p88 = scmp.ne.s32.totalorder %s80, %s83
      %p89 = scmp.eq.s32.totalorder %s18, 0
      %p90 = por %p88, %p89
      %p91 = scmp.ne.s32.totalorder %s80, %s83
      %p92 = scmp.eq.s32.totalorder %s23, 1
      %p93 = por %p91, %p92
      %p94 = scmp.ne.s32.totalorder %s83, %s84
      %p95 = scmp.eq.s32.totalorder %s23, 0
      %p96 = por %p94, %p95
      %p97 = scmp.ne.s32.totalorder %s83, %s84
      %p98 = scmp.eq.s32.totalorder %s24, 1
      %p99 = por %p97, %p98
      %p101 = scmp.ne.s32.totalorder %s84, %s100
      %p102 = scmp.eq.s32.totalorder %s24, 0
      %p103 = por %p101, %p102
      %s105 = sadd.s32 %s104, 1
      %p108 = scmp.eq.s32.totalorder %s18, 1
      %p109 = scmp.ne.s32.totalorder %s104, %s106
      %p110 = scmp.eq.s32.totalorder %s18, 0
      %p111 = por %p109, %p110
      %p112 = scmp.ne.s32.totalorder %s104, %s106
      %p113 = scmp.eq.s32.totalorder %s23, 1
      %p114 = por %p112, %p113
      %p115 = scmp.ne.s32.totalorder %s106, %s107
      %p116 = scmp.eq.s32.totalorder %s23, 0
      %p117 = por %p115, %p116
      %p118 = scmp.ne.s32.totalorder %s106, %s107
      %p119 = scmp.eq.s32.totalorder %s24, 1
      %p120 = por %p118, %p119
      %p122 = scmp.ne.s32.totalorder %s107, %s121
      %p123 = scmp.eq.s32.totalorder %s24, 0
      %p124 = por %p122, %p123
      %s126 = sadd.s32 %s125, 1
      %p129 = scmp.eq.s32.totalorder %s18, 1
      %p130 = scmp.ne.s32.totalorder %s125, %s127
      %p131 = scmp.eq.s32.totalorder %s18, 0
      %p132 = por %p130, %p131
      %p133 = scmp.ne.s32.totalorder %s125, %s127
      %p134 = scmp.eq.s32.totalorder %s23, 1
      %p135 = por %p133, %p134
      %p136 = scmp.ne.s32.totalorder %s127, %s128
      %p137 = scmp.eq.s32.totalorder %s23, 0
      %p138 = por %p136, %p137
      %p139 = scmp.ne.s32.totalorder %s127, %s128
      %p140 = scmp.eq.s32.totalorder %s24, 1
      %p141 = por %p139, %p140
      %p143 = scmp.ne.s32.totalorder %s128, %s142
      %p144 = scmp.eq.s32.totalorder %s24, 0
      %p145 = por %p143, %p144
      %s147 = sadd.s32 %s146, 1
      %p150 = scmp.eq.s32.totalorder %s18, 1
      %p151 = scmp.ne.s32.totalorder %s146, %s148
      %p152 = scmp.eq.s32.totalorder %s18, 0
      %p153 = por %p151, %p152
      %p154 = scmp.ne.s32.totalorder %s146, %s148
      %p155 = scmp.eq.s32.totalorder %s23, 1
      %p156 = por %p154, %p155
      %p157 = scmp.ne.s32.totalorder %s148, %s149
      %p158 = scmp.eq.s32.totalorder %s23, 0
      %p159 = por %p157, %p158
      %p160 = scmp.ne.s32.totalorder %s148, %s149
      %p161 = scmp.eq.s32.totalorder %s24, 1
      %p162 = por %p160, %p161
      %p164 = scmp.ne.s32.totalorder %s149, %s163
      %p165 = scmp.eq.s32.totalorder %s24, 0
      %p166 = por %p164, %p165
      %s168 = sadd.s32 %s167, 1
      %p171 = scmp.eq.s32.totalorder %s18, 1
      %p172 = scmp.ne.s32.totalorder %s167, %s169
      %p173 = scmp.eq.s32.totalorder %s18, 0
      %p174 = por %p172, %p173
      %p175 = scmp.ne.s32.totalorder %s167, %s169
      %p176 = scmp.eq.s32.totalorder %s23, 1
      %p177 = por %p175, %p176
      %p178 = scmp.ne.s32.totalorder %s169, %s170
      %p179 = scmp.eq.s32.totalorder %s23, 0
      %p180 = por %p178, %p179
      %p181 = scmp.ne.s32.totalorder %s169, %s170
      %p182 = scmp.eq.s32.totalorder %s24, 1
      %p183 = por %p181, %p182
      %p185 = scmp.ne.s32.totalorder %s170, %s184
      %p186 = scmp.eq.s32.totalorder %s24, 0
      %p187 = por %p185, %p186
      %s188 = ssub.s32 %s18, %s25
      %p189 = scmp.eq.s32.totalorder %s188, 0
      %s191 = sadd.s32 %s190, 1
      %s192 = scalar_select %p189, %s190, %s191
      %p195 = pneg %p189
      %p196 = scmp.eq.s32.totalorder %s18, 1
      %p197 = por %p195, %p196
      %p198 = scmp.ne.s32.totalorder %s190, %s193
      %p199 = scmp.eq.s32.totalorder %s18, 0
      %p200 = por %p198, %p199
      %p201 = scmp.ne.s32.totalorder %s190, %s193
      %p202 = scmp.eq.s32.totalorder %s23, 1
      %p203 = por %p201, %p202
      %p204 = scmp.ne.s32.totalorder %s193, %s194
      %p205 = scmp.eq.s32.totalorder %s23, 0
      %p206 = por %p204, %p205
      %p207 = scmp.ne.s32.totalorder %s193, %s194
      %p208 = scmp.eq.s32.totalorder %s24, 1
      %p209 = por %p207, %p208
      %p211 = scmp.ne.s32.totalorder %s194, %s210
      %p212 = scmp.eq.s32.totalorder %s24, 0
      %p213 = por %p211, %p212
      %s214 = ssub.s32 %s18, %s25
      %p215 = scmp.eq.s32.totalorder %s214, 0
      %s217 = sadd.s32 %s216, 1
      %s218 = scalar_select %p215, %s216, %s217
      %p221 = pneg %p215
      %p222 = scmp.eq.s32.totalorder %s18, 1
      %p223 = por %p221, %p222
      %p224 = scmp.ne.s32.totalorder %s216, %s219
      %p225 = scmp.eq.s32.totalorder %s18, 0
      %p226 = por %p224, %p225
      %p227 = scmp.ne.s32.totalorder %s216, %s219
      %p228 = scmp.eq.s32.totalorder %s23, 1
      %p229 = por %p227, %p228
      %p230 = scmp.ne.s32.totalorder %s219, %s220
      %p231 = scmp.eq.s32.totalorder %s23, 0
      %p232 = por %p230, %p231
      %p233 = scmp.ne.s32.totalorder %s219, %s220
      %p234 = scmp.eq.s32.totalorder %s24, 1
      %p235 = por %p233, %p234
      %p237 = scmp.ne.s32.totalorder %s220, %s236
      %p238 = scmp.eq.s32.totalorder %s24, 0
      %p239 = por %p237, %p238
      %p240 = scmp.le.s32.totalorder 1, %s18
      %p241 = scmp.lt.s32.totalorder %s18, 3
      %p242 = pnand %p240, %p241
      %p243 = pneg %p242
      // Predicated region
      $region9: #{tpu_custom_call.1} parent=5 // pred_check
        _
      $region10: #{tpu_custom_call.1} parent=5 // pred_check_branch
        %245 = sbr.rel (%p242) target = $region12
      $region11: #{tpu_custom_call.1} parent=5 // pred_region
        %s246 = ssub.s32 %s18, 1
        // Predicated region
        $region13: #{tpu_custom_call.1} parent=11 // pred_check
          %p247 = pneg %p117
        $region14: #{tpu_custom_call.1} parent=11 // pred_check_branch
          %249 = sbr.rel (%p247) target = $region16
        $region15: #{tpu_custom_call.1} parent=11 // pred_region
          _
        $region16: #{tpu_custom_call.1} parent=11 // pred_fallthru
          _
        // Predicated region
        $region17: #{tpu_custom_call.1} parent=11 // pred_check
          %p250 = pneg %p138
        $region18: #{tpu_custom_call.1} parent=11 // pred_check_branch
          %252 = sbr.rel (%p250) target = $region20
        $region19: #{tpu_custom_call.1} parent=11 // pred_region
          _
        $region20: #{tpu_custom_call.1} parent=11 // pred_fallthru
          _
        // Predicated region
        $region21: #{tpu_custom_call.1} parent=11 // pred_check
          %p253 = pneg %p159
        $region22: #{tpu_custom_call.1} parent=11 // pred_check_branch
          %255 = sbr.rel (%p253) target = $region24
        $region23: #{tpu_custom_call.1} parent=11 // pred_region
          _
        $region24: #{tpu_custom_call.1} parent=11 // pred_fallthru
          _
        // Predicated region
        $region25: #{tpu_custom_call.1} parent=11 // pred_check
          %p256 = pneg %p180
        $region26: #{tpu_custom_call.1} parent=11 // pred_check_branch
          %258 = sbr.rel (%p256) target = $region28
        $region27: #{tpu_custom_call.1} parent=11 // pred_region
          _
        $region28: #{tpu_custom_call.1} parent=11 // pred_fallthru
          _
      $region12: #{tpu_custom_call.1} parent=5 // pred_fallthru
        _
      %p259 = scmp.lt.s32.totalorder %s18, 2
      // Predicated region
      $region29: #{tpu_custom_call.1} parent=5 // pred_check
        %p260 = pneg %p259
      $region30: #{tpu_custom_call.1} parent=5 // pred_check_branch
        %262 = sbr.rel (%p260) target = $region32
      $region31: #{tpu_custom_call.1} parent=5 // pred_region
        // Predicated region
        $region33: #{tpu_custom_call.1} parent=31 // pred_check
          %p263 = pneg %p38
        $region34: #{tpu_custom_call.1} parent=31 // pred_check_branch
          %265 = sbr.rel (%p263) target = $region36
        $region35: #{tpu_custom_call.1} parent=31 // pred_region
          %p266 = scmp.lt.s32.totalorder %s18, 1
          %s267 = scalar_select %p266, %s18, 1
          %s268 = smul.addr %s267, 10
          %s269 = smul.addr %s268, 8
          %s270 = scalar_lea.vmem %s0, %s269
        $region36: #{tpu_custom_call.1} parent=31 // pred_fallthru
          _
        // Predicated region
        $region37: #{tpu_custom_call.1} parent=31 // pred_check
          %p271 = pneg %p64
        $region38: #{tpu_custom_call.1} parent=31 // pred_check_branch
          %273 = sbr.rel (%p271) target = $region40
        $region39: #{tpu_custom_call.1} parent=31 // pred_region
          %p274 = scmp.lt.s32.totalorder %s18, 1
          %s275 = scalar_select %p274, %s18, 1
          %s276 = smul.addr %s275, 12
          %s277 = smul.addr %s276, 8
          %s278 = scalar_lea.vmem %s1, %s277
        $region40: #{tpu_custom_call.1} parent=31 // pred_fallthru
          _
        // Predicated region
        $region41: #{tpu_custom_call.1} parent=31 // pred_check
          %p279 = pneg %p90
        $region42: #{tpu_custom_call.1} parent=31 // pred_check_branch
          %281 = sbr.rel (%p279) target = $region44
        $region43: #{tpu_custom_call.1} parent=31 // pred_region
          %p282 = scmp.lt.s32.totalorder %s18, 1
          %s283 = scalar_select %p282, %s18, 1
          %s284 = smul.addr %s283, 2
          %s285 = smul.addr %s284, 2
          %s286 = scalar_lea.vmem %s2, %s285
        $region44: #{tpu_custom_call.1} parent=31 // pred_fallthru
          _
      $region32: #{tpu_custom_call.1} parent=5 // pred_fallthru
        _
      %p287 = scmp.le.s32.totalorder 1, %s18
      %p288 = scmp.lt.s32.totalorder %s18, 3
      %p289 = pnand %p287, %p288
      %p290 = pneg %p289
      // Predicated region
      $region45: #{tpu_custom_call.1} parent=5 // pred_check
        _
      $region46: #{tpu_custom_call.1} parent=5 // pred_check_branch
        %292 = sbr.rel (%p289) target = $region48
      $region47: #{tpu_custom_call.1} parent=5 // pred_region
        %s293 = ssub.s32 %s18, 1
        %p294 = scmp.lt.s32.totalorder %s23, 1
        %s295 = scalar_select %p294, %s23, 1
        %s296 = smul.addr %s295, 10
        %s297 = smul.addr %s296, 8
        %s298 = scalar_lea.vmem %s0, %s297
        %p299 = pneg %p44
        %p300 = pneg %p41
        %p301 = scmp.lt.s32.totalorder %s23, 1
        %s302 = scalar_select %p301, %s23, 1
        %s303 = smul.addr %s302, 12
        %s304 = smul.addr %s303, 8
        %s305 = scalar_lea.vmem %s1, %s304
        %p306 = pneg %p70
        %p307 = pneg %p67
        %p308 = scmp.lt.s32.totalorder %s23, 1
        %s309 = scalar_select %p308, %s23, 1
        %s310 = smul.addr %s309, 2
        %s311 = smul.addr %s310, 2
        %s312 = scalar_lea.vmem %s2, %s311
        %p313 = pneg %p96
        %p314 = pneg %p93
        %p315 = pneg %p117
        %p316 = pneg %p114
        %p317 = pneg %p138
        %p318 = pneg %p135
        %p319 = pneg %p159
        %p320 = pneg %p156
        %p321 = pneg %p180
        %p322 = pneg %p177
        %p323 = pneg %p206
        %p324 = pneg %p203
        %s325 = sand.u32 %s193, 1
        %s326 = scalar_lea.sflag [#allocation3], %s325
        %s327 = sand.u32 %s193, 1
        %s328 = smul.addr %s327, 16
        %s329 = scalar_lea.vmem [#allocation2], %s328
        %p330 = pneg %p232
        %p331 = pneg %p229
        %p332 = scmp.lt.s32.totalorder %s23, 1
        %s333 = scalar_select %p332, %s23, 1
        %s334 = smul.addr %s333, 2
        %s335 = smul.addr %s334, 4
        %s336 = scalar_lea.vmem %s8, %s335
        %p337 = scmp.lt.s32.totalorder %s23, 1
        %s338 = scalar_select %p337, %s23, 1
        %s339 = smul.addr %s338, 10
        %s340 = smul.addr %s339, 8
        %s341 = scalar_lea.vmem %s0, %s340
        %p342 = scmp.lt.s32.totalorder %s23, 1
        %s343 = scalar_select %p342, %s23, 1
        %s344 = smul.addr %s343, 12
        %s345 = smul.addr %s344, 8
        %s346 = scalar_lea.vmem %s1, %s345
        %p347 = scmp.lt.s32.totalorder %s23, 1
        %s348 = scalar_select %p347, %s23, 1
        %s349 = smul.addr %s348, 2
        %s350 = smul.addr %s349, 2
        %s351 = scalar_lea.vmem %s2, %s350
        %p352 = scmp.lt.s32.totalorder %s23, 1
        %s353 = scalar_select %p352, %s23, 1
        %s354 = smul.addr %s353, 2
        %s355 = smul.addr %s354, 4
        %s356 = scalar_lea.vmem %s8, %s355
        %v358 = vld [vmem:[%s346] sm:$0xff]
        %v359 = vld [vmem:[%s346 + $0x8] sm:$0xff]
        %v360 = vld [vmem:[%s346 + $0x10] sm:$0xff]
        %v361 = vld [vmem:[%s346 + $0x18] sm:$0xff]
        %v362 = vld [vmem:[%s346 + $0x20] sm:$0xff]
        %v363 = vld [vmem:[%s346 + $0x28] sm:$0xff]
        %v364 = vld [vmem:[%s346 + $0x30] sm:$0xff]
        %v365 = vld [vmem:[%s346 + $0x38] sm:$0xff]
        %v366 = vld [vmem:[%s346 + $0x40] sm:$0xff]
        %v367 = vld [vmem:[%s346 + $0x48] sm:$0xff]
        %v368 = vld [vmem:[%s346 + $0x50] sm:$0xff]
        %v369 = vld [vmem:[%s346 + $0x58] sm:$0xff]
        %v370 = vld [vmem:[%s351] sm:$0xf]
        %v371 = vld [vmem:[%s3] sm:$0xf]
        %v372 = vld [vmem:[%s341] sm:$0xff]
        %v373 = vld [vmem:[%s341 + $0x8] sm:$0xff]
        %v374 = vld [vmem:[%s341 + $0x10] sm:$0xff]
        %v375 = vld [vmem:[%s341 + $0x18] sm:$0xff]
        %v376 = vld [vmem:[%s341 + $0x20] sm:$0xff]
        %v377 = vld [vmem:[%s341 + $0x28] sm:$0xff]
        %v378 = vld [vmem:[%s341 + $0x30] sm:$0xff]
        %v379 = vld [vmem:[%s341 + $0x38] sm:$0xff]
        %v380 = vld [vmem:[%s341 + $0x40] sm:$0xf]
        %v381 = vld [vmem:[%s341 + $0x48] sm:$0xf]
        %383 = vset.pattern.permute.xlu0 0
        %384 = vperm.xlu0 %383, %v358
        %v385 = vpop.permute.xlu0 %384
        %388 = vset.pattern.permute.xlu0 0
        %389 = vperm.xlu0 %388, %v359
        %v390 = vpop.permute.xlu0 %389
        %393 = vset.pattern.permute.xlu0 0
        %394 = vperm.xlu0 %393, %v360
        %v395 = vpop.permute.xlu0 %394
        %398 = vset.pattern.permute.xlu0 0
        %399 = vperm.xlu0 %398, %v361
        %v400 = vpop.permute.xlu0 %399
        %403 = vset.pattern.permute.xlu0 0
        %404 = vperm.xlu0 %403, %v362
        %v405 = vpop.permute.xlu0 %404
        %v407 = vmul.f32 %v372, %v385
        %v408 = vmul.f32 %v373, %v385
        %v409 = vmul.f32 %v374, %v390
        %v410 = vmul.f32 %v375, %v390
        %v411 = vmul.f32 %v376, %v395
        %v412 = vmul.f32 %v377, %v395
        %v413 = vmul.f32 %v378, %v400
        %v414 = vmul.f32 %v379, %v400
        %v415 = vmul.f32 %v380, %v405
        %v416 = vmul.f32 %v381, %v405
        %v417 = vpack.c.bf16 %v409, %v407
        %v418 = vpack.c.bf16 %v410, %v408
        %v419 = vpack.c.bf16 %v413, %v411
        %v420 = vpack.c.bf16 %v414, %v412
        %v421 = vpack.c.bf16 %v415, %v415
        %v422 = vpack.c.bf16 %v416, %v416
        %v423 = vld [vmem:[%s4] sm:$0xf]
        %vm424 = vcmask 293888
        %v426 = vsel %vm424, %v423, 0
        %vm428 = vcmask 1041408
        %v430 = vsel %vm428, %v421, 0
        %v433 = vsel %vm428, %v422, 0
        %435 = vmatprep.subr.bf16.mxu0 %v418
        %436 = vmatpush1.bf16.msra.mxu0 %v417
        %437 = vmatprep.subr.bf16.mxu0 %v420
        %438 = vmatpush1.bf16.msra.mxu0 %v419
        %439 = vmatprep.subr.bf16.mxu0 %v433
        %440 = vmatpush1.bf16.msra.mxu0 %v430
        %441 = vmatprep.subr.bf16.mxu0 0
        %442 = vmatpush1.bf16.msra.mxu0 0
        %443 = vmatprep.subr.bf16.mxu0 0
        %444 = vmatpush1.bf16.msra.mxu0 0
        %445 = vmatprep.subr.bf16.mxu0 0
        %446 = vmatpush1.bf16.msra.mxu0 0
        %447 = vmatprep.subr.bf16.mxu0 0
        %448 = vmatpush1.bf16.msra.mxu0 0
        %449 = vmatprep.subr.bf16.mxu0 0
        %450 = vmatpush1.bf16.msra.mxu0 0
        %451 = vmatprep.subr.bf16.mxu0 0
        %452 = vmatpush1.bf16.msra.mxu0 0
        %453 = vmatprep.subr.bf16.mxu0 0
        %454 = vmatpush1.bf16.msra.mxu0 0
        %455 = vmatprep.subr.bf16.mxu0 0
        %456 = vmatpush1.bf16.msra.mxu0 0
        %457 = vmatprep.subr.bf16.mxu0 0
        %458 = vmatpush1.bf16.msra.mxu0 0
        %459 = vmatprep.subr.bf16.mxu0 0
        %460 = vmatpush1.bf16.msra.mxu0 0
        %461 = vmatprep.subr.bf16.mxu0 0
        %462 = vmatpush1.bf16.msra.mxu0 0
        %463 = vmatprep.subr.bf16.mxu0 0
        %464 = vmatpush1.bf16.msra.mxu0 0
        %465 = vmatprep.subr.bf16.mxu0 0
        %466 = vmatpush1.bf16.msra.mxu0 0
        %467 = vmatprep.mubr.bf16.mxu0 0
        %468 = vmatmul.mubr.bf16.gmra.mrb[0].mxu0 %v426
        %v469 = vpop.f32.mrb[0].mxu0
        %v470 = vadd.f32 0.0, %v469
        %v471 = vpop.f32.mrb[0].mxu0
        %v472 = vadd.f32 0.0, %v471
        %v473 = vpop.f32.mrb[0].mxu0
        %v474 = vpop.f32.mrb[0].mxu0
        %475 = vdwg.mxu0
        %477 = vset.pattern.permute.xlu0 0
        %478 = vperm.xlu0 %477, %v363
        %v479 = vpop.permute.xlu0 %478
        %v481 = vmul.f32 %v470, %v479
        %v482 = vmul.f32 %v472, %v479
        %v484 = vlaneseq
        %v485 = vshrl.u32 %v484, 7
        %v486 = vsub.s32 0, %v485
        %v487 = vrot.slane %v370, %v486
        %v488 = vlaneseq
        %v489 = vshrl.u32 %v488, 7
        %v490 = vsub.s32 2, %v489
        %v491 = vrot.slane %v370, %v490
        %v494 = vlaneseq
        %v495 = vshrl.u32 %v494, 7
        %v496 = vsub.s32 0, %v495
        %v497 = vrot.slane %v487, %v496
        %v498 = vlaneseq
        %v499 = vshrl.u32 %v498, 7
        %v500 = vsub.s32 0, %v499
        %v501 = vrot.slane %v491, %v500
        %v502 = vadd.f32 %v481, %v497
        %v503 = vadd.f32 %v482, %v501
        %505 = vset.pattern.permute.xlu0 0
        %506 = vperm.xlu0 %505, %v367
        %v507 = vpop.permute.xlu0 %506
        %v509 = vadd.f32 %v502, %v507
        %v510 = vadd.f32 %v503, %v507
        %vm511 = vcmp.ge.f32.partialorder %v509, 0.0
        %vm512 = vcmp.ge.f32.partialorder %v510, 0.0
        %v513 = vmul.f32 %v509, 0.2
        %v514 = vmul.f32 %v510, 0.2
        %v515 = vsel %vm511, %v509, %v513
        %v516 = vsel %vm512, %v510, %v514
        %518 = vset.pattern.permute.xlu0 0
        %519 = vperm.xlu0 %518, %v364
        %v520 = vpop.permute.xlu0 %519
        %v522 = vmul.f32 %v515, %v520
        %v523 = vmul.f32 %v516, %v520
        %526 = vrot.lane.b32.xlu0 %v522, 17
        %v527 = vpop.permute.xlu0 %526
        %528 = vrot.lane.b32.xlu0 %v523, 17
        %v529 = vpop.permute.xlu0 %528
        %vm530 = vcmask 138240
        %v531 = vsel %vm530, %v527, %v529
        %v534 = vsel %vm530, 0.0, %v527
        %v536 = vlaneseq
        %v537 = vshrl.u32 %v536, 7
        %v538 = vsub.s32 0, %v537
        %v539 = vrot.slane %v371, %v538
        %v540 = vlaneseq
        %v541 = vshrl.u32 %v540, 7
        %v542 = vsub.s32 2, %v541
        %v543 = vrot.slane %v371, %v542
        %v546 = vlaneseq
        %v547 = vshrl.u32 %v546, 7
        %v548 = vsub.s32 0, %v547
        %v549 = vrot.slane %v539, %v548
        %v550 = vlaneseq
        %v551 = vshrl.u32 %v550, 7
        %v552 = vsub.s32 0, %v551
        %v553 = vrot.slane %v543, %v552
        %v554 = vmul.f32 %v534, %v549
        %v555 = vmul.f32 %v531, %v553
        %556 = vrot.lane.b32.xlu0 %v522, 16
        %v557 = vpop.permute.xlu0 %556
        %558 = vrot.lane.b32.xlu0 %v523, 16
        %v559 = vpop.permute.xlu0 %558
        %vm560 = vcmask 130048
        %v561 = vsel %vm560, %v557, %v559
        %v564 = vsel %vm560, 0.0, %v557
        %565 = vrot.lane.b32.xlu0 %v522, 15
        %v566 = vpop.permute.xlu0 %565
        %567 = vrot.lane.b32.xlu0 %v523, 15
        %v568 = vpop.permute.xlu0 %567
        %vm569 = vcmask 121856
        %v570 = vsel %vm569, %v566, %v568
        %v573 = vsel %vm569, 0.0, %v566
        %v574 = vlaneseq
        %v575 = vshrl.u32 %v574, 7
        %v576 = vsub.s32 1, %v575
        %v577 = vrot.slane %v371, %v576
        %v578 = vlaneseq
        %v579 = vshrl.u32 %v578, 7
        %v580 = vsub.s32 3, %v579
        %v581 = vrot.slane %v371, %v580
        %v584 = vlaneseq
        %v585 = vshrl.u32 %v584, 7
        %v586 = vsub.s32 1, %v585
        %v587 = vrot.slane %v577, %v586
        %v588 = vlaneseq
        %v589 = vshrl.u32 %v588, 7
        %v590 = vsub.s32 1, %v589
        %v591 = vrot.slane %v581, %v590
        %v592 = vmul.f32 %v573, %v587
        %v593 = vmul.f32 %v570, %v591
        %594 = vrot.lane.b32.xlu0 %v522, 1
        %v595 = vpop.permute.xlu0 %594
        %596 = vrot.lane.b32.xlu0 %v523, 1
        %v597 = vpop.permute.xlu0 %596
        %vm598 = vcmask 7168
        %v599 = vsel %vm598, %v595, %v597
        %v602 = vsel %vm598, 0.0, %v595
        %v603 = vmul.f32 %v602, %v549
        %v604 = vmul.f32 %v599, %v553
        %605 = vrot.lane.b32.xlu0 %v522, 127
        %v606 = vpop.permute.xlu0 %605
        %607 = vrot.lane.b32.xlu0 %v523, 127
        %v608 = vpop.permute.xlu0 %607
        %vm609 = vcmask 1039360
        %v610 = vsel %vm609, %v606, %v608
        %v613 = vsel %vm609, %v608, 0.0
        %v614 = vmul.f32 %v610, %v587
        %v615 = vmul.f32 %v613, %v591
        %616 = vrot.lane.b32.xlu0 %v522, 113
        %v617 = vpop.permute.xlu0 %616
        %618 = vrot.lane.b32.xlu0 %v523, 113
        %v619 = vpop.permute.xlu0 %618
        %vm620 = vcmask 924672
        %v621 = vsel %vm620, %v617, %v619
        %v624 = vsel %vm620, %v619, 0.0
        %v625 = vmul.f32 %v621, %v549
        %v626 = vmul.f32 %v624, %v553
        %627 = vrot.lane.b32.xlu0 %v522, 112
        %v628 = vpop.permute.xlu0 %627
        %629 = vrot.lane.b32.xlu0 %v523, 112
        %v630 = vpop.permute.xlu0 %629
        %vm631 = vcmask 916480
        %v632 = vsel %vm631, %v628, %v630
        %v635 = vsel %vm631, %v630, 0.0
        %636 = vrot.lane.b32.xlu0 %v522, 111
        %v637 = vpop.permute.xlu0 %636
        %638 = vrot.lane.b32.xlu0 %v523, 111
        %v639 = vpop.permute.xlu0 %638
        %vm640 = vcmask 908288
        %v641 = vsel %vm640, %v637, %v639
        %v644 = vsel %vm640, %v639, 0.0
        %v645 = vmul.f32 %v641, %v587
        %v646 = vmul.f32 %v644, %v591
        %v647 = vpack.c.bf16 %v564, %v554
        %v648 = vpack.c.bf16 %v561, %v555
        %v649 = vpack.c.bf16 %v603, %v592
        %v650 = vpack.c.bf16 %v604, %v593
        %v651 = vpack.c.bf16 %v614, %v522
        %v652 = vpack.c.bf16 %v615, %v523
        %v653 = vpack.c.bf16 %v632, %v625
        %v654 = vpack.c.bf16 %v635, %v626
        %v655 = vpack.c.bf16 %v645, %v645
        %v656 = vpack.c.bf16 %v646, %v646
        %v657 = vld [vmem:[%s5] sm:$0xf]
        %vm658 = vcmask 588800
        %v660 = vsel %vm658, %v657, 0
        %vm662 = vcmask 1043456
        %v664 = vsel %vm662, %v655, 0
        %v667 = vsel %vm662, %v656, 0
        %669 = vmatprep.subr.bf16.mxu0 %v648
        %670 = vmatpush1.bf16.msra.mxu0 %v647
        %671 = vmatprep.subr.bf16.mxu0 %v650
        %672 = vmatpush1.bf16.msra.mxu0 %v649
        %673 = vmatprep.subr.bf16.mxu0 %v652
        %674 = vmatpush1.bf16.msra.mxu0 %v651
        %675 = vmatprep.subr.bf16.mxu0 %v654
        %676 = vmatpush1.bf16.msra.mxu0 %v653
        %677 = vmatprep.subr.bf16.mxu0 %v667
        %678 = vmatpush1.bf16.msra.mxu0 %v664
        %679 = vmatprep.subr.bf16.mxu0 0
        %680 = vmatpush1.bf16.msra.mxu0 0
        %681 = vmatprep.subr.bf16.mxu0 0
        %682 = vmatpush1.bf16.msra.mxu0 0
        %683 = vmatprep.subr.bf16.mxu0 0
        %684 = vmatpush1.bf16.msra.mxu0 0
        %685 = vmatprep.subr.bf16.mxu0 0
        %686 = vmatpush1.bf16.msra.mxu0 0
        %687 = vmatprep.subr.bf16.mxu0 0
        %688 = vmatpush1.bf16.msra.mxu0 0
        %689 = vmatprep.subr.bf16.mxu0 0
        %690 = vmatpush1.bf16.msra.mxu0 0
        %691 = vmatprep.subr.bf16.mxu0 0
        %692 = vmatpush1.bf16.msra.mxu0 0
        %693 = vmatprep.subr.bf16.mxu0 0
        %694 = vmatpush1.bf16.msra.mxu0 0
        %695 = vmatprep.subr.bf16.mxu0 0
        %696 = vmatpush1.bf16.msra.mxu0 0
        %697 = vmatprep.subr.bf16.mxu0 0
        %698 = vmatpush1.bf16.msra.mxu0 0
        %699 = vmatprep.subr.bf16.mxu0 0
        %700 = vmatpush1.bf16.msra.mxu0 0
        %701 = vmatprep.mubr.bf16.mxu0 0
        %702 = vmatmul.mubr.bf16.gmra.mrb[0].mxu0 %v660
        %v703 = vpop.f32.mrb[0].mxu0
        %v704 = vadd.f32 0.0, %v703
        %v705 = vpop.f32.mrb[0].mxu0
        %v706 = vadd.f32 0.0, %v705
        %v707 = vpop.f32.mrb[0].mxu0
        %v708 = vpop.f32.mrb[0].mxu0
        %709 = vdwg.mxu0
        %711 = vset.pattern.permute.xlu0 0
        %712 = vperm.xlu0 %711, %v365
        %v713 = vpop.permute.xlu0 %712
        %v715 = vmul.f32 %v704, %v713
        %v716 = vmul.f32 %v706, %v713
        %v717 = vlaneseq
        %v718 = vshrl.u32 %v717, 7
        %v719 = vsub.s32 1, %v718
        %v720 = vrot.slane %v370, %v719
        %v721 = vlaneseq
        %v722 = vshrl.u32 %v721, 7
        %v723 = vsub.s32 3, %v722
        %v724 = vrot.slane %v370, %v723
        %v727 = vlaneseq
        %v728 = vshrl.u32 %v727, 7
        %v729 = vsub.s32 1, %v728
        %v730 = vrot.slane %v720, %v729
        %v731 = vlaneseq
        %v732 = vshrl.u32 %v731, 7
        %v733 = vsub.s32 1, %v732
        %v734 = vrot.slane %v724, %v733
        %v735 = vadd.f32 %v715, %v730
        %v736 = vadd.f32 %v716, %v734
        %738 = vset.pattern.permute.xlu0 0
        %739 = vperm.xlu0 %738, %v368
        %v740 = vpop.permute.xlu0 %739
        %v742 = vadd.f32 %v735, %v740
        %v743 = vadd.f32 %v736, %v740
        %vm744 = vcmp.ge.f32.partialorder %v742, 0.0
        %vm745 = vcmp.ge.f32.partialorder %v743, 0.0
        %v746 = vmul.f32 %v742, 0.2
        %v747 = vmul.f32 %v743, 0.2
        %v748 = vsel %vm744, %v742, %v746
        %v749 = vsel %vm745, %v743, %v747
        %751 = vset.pattern.permute.xlu0 0
        %752 = vperm.xlu0 %751, %v366
        %v753 = vpop.permute.xlu0 %752
        %v755 = vmul.f32 %v748, %v753
        %v756 = vmul.f32 %v749, %v753
        %v757 = vpack.c.bf16 %v755, %v755
        %v758 = vpack.c.bf16 %v756, %v756
        %v759 = vld [vmem:[%s6] sm:$0x3]
        %761 = vset.pattern.permute.xlu0 0
        %762 = vperm.xlu0 %761, %v369
        %v763 = vpop.permute.xlu0 %762
        %vm765 = vcmask 64512
        %v767 = vsel %vm765, %v759, 0
        %v770 = vsel %vm662, %v757, 0
        %v773 = vsel %vm662, %v758, 0
        %775 = vmatprep.subr.bf16.mxu0 %v773
        %776 = vmatpush1.bf16.msra.mxu0 %v770
        %777 = vmatprep.subr.bf16.mxu0 0
        %778 = vmatpush1.bf16.msra.mxu0 0
        %779 = vmatprep.subr.bf16.mxu0 0
        %780 = vmatpush1.bf16.msra.mxu0 0
        %781 = vmatprep.subr.bf16.mxu0 0
        %782 = vmatpush1.bf16.msra.mxu0 0
        %783 = vmatprep.subr.bf16.mxu0 0
        %784 = vmatpush1.bf16.msra.mxu0 0
        %785 = vmatprep.subr.bf16.mxu0 0
        %786 = vmatpush1.bf16.msra.mxu0 0
        %787 = vmatprep.subr.bf16.mxu0 0
        %788 = vmatpush1.bf16.msra.mxu0 0
        %789 = vmatprep.subr.bf16.mxu0 0
        %790 = vmatpush1.bf16.msra.mxu0 0
        %791 = vmatprep.subr.bf16.mxu0 0
        %792 = vmatpush1.bf16.msra.mxu0 0
        %793 = vmatprep.subr.bf16.mxu0 0
        %794 = vmatpush1.bf16.msra.mxu0 0
        %795 = vmatprep.subr.bf16.mxu0 0
        %796 = vmatpush1.bf16.msra.mxu0 0
        %797 = vmatprep.subr.bf16.mxu0 0
        %798 = vmatpush1.bf16.msra.mxu0 0
        %799 = vmatprep.subr.bf16.mxu0 0
        %800 = vmatpush1.bf16.msra.mxu0 0
        %801 = vmatprep.subr.bf16.mxu0 0
        %802 = vmatpush1.bf16.msra.mxu0 0
        %803 = vmatprep.subr.bf16.mxu0 0
        %804 = vmatpush1.bf16.msra.mxu0 0
        %805 = vmatprep.subr.bf16.mxu0 0
        %806 = vmatpush1.bf16.msra.mxu0 0
        %807 = vmatprep.mubr.bf16.mxu0 0
        %808 = vmatmul.mubr.bf16.gmra.mrb[0].mxu0 %v767
        %v809 = vpop.f32.mrb[0].mxu0
        %v810 = vadd.f32 %v763, %v809
        %v811 = vpop.f32.mrb[0].mxu0
        %v812 = vadd.f32 %v763, %v811
        %v813 = vpop.f32.mrb[0].mxu0
        %v814 = vpop.f32.mrb[0].mxu0
        %815 = vdwg.mxu0
        %vm816 = vcmp.ge.f32.partialorder %v810, 0.0
        %vm817 = vcmp.ge.f32.partialorder %v812, 0.0
        %v818 = vmul.f32 %v810, 0.2
        %v819 = vmul.f32 %v812, 0.2
        %v820 = vsel %vm816, %v810, %v818
        %v821 = vsel %vm817, %v812, %v819
        %822 = vst [vmem:[%s329] sm:$0xff] %v748
        %823 = vst [vmem:[%s329 + $0x8] sm:$0xff] %v749
        %v826 = vcombine.low %v820, %v821
        %828 = vst [vmem:[%s356] sm:$0x77] %v826
        %s829 = sand.u32 %s193, 1
        %s830 = scalar_lea.sflag [#allocation3], %s829
        %s831 = sand.u32 %s193, 1
        %s832 = smul.addr %s831, 16
        %s833 = scalar_lea.vmem [#allocation2], %s832
        %p834 = scmp.lt.s32.totalorder %s23, 1
        %s835 = scalar_select %p834, %s23, 1
        %s836 = smul.addr %s835, 2
        %s837 = smul.addr %s836, 4
        %s838 = scalar_lea.vmem %s8, %s837
        // Predicated region
        $region49: #{tpu_custom_call.1} parent=47 // pred_check
          %p839 = pneg %p203
        $region50: #{tpu_custom_call.1} parent=47 // pred_check_branch
          %841 = sbr.rel (%p839) target = $region52
        $region51: #{tpu_custom_call.1} parent=47 // pred_region
          %s843 = ssub.s32 256, 256
          %844 = vsyncadd %s830, %s843
          %s845 = smul.addr %s23, 2
          %s846 = smul.addr %s845, 128
          %s847 = scalar_lea.hbm %s7, %s846
          %s849 = sshll.u32 %s833, 4
          %s850 = int_to_ptr.vmem [resolvable:$true] %s849
          %852 = dma.vmem_to_hbm [thread:$0]  %s850, 256, %s847, %s830
        $region52: #{tpu_custom_call.1} parent=47 // pred_fallthru
          _
        // Predicated region
        $region53: #{tpu_custom_call.1} parent=47 // pred_check
          %p853 = pneg %p229
        $region54: #{tpu_custom_call.1} parent=47 // pred_check_branch
          %855 = sbr.rel (%p853) target = $region56
        $region55: #{tpu_custom_call.1} parent=47 // pred_region
          _
        $region56: #{tpu_custom_call.1} parent=47 // pred_fallthru
          _
      $region48: #{tpu_custom_call.1} parent=5 // pred_fallthru
        _
      %p856 = scmp.le.s32.totalorder 2, %s18
      // Predicated region
      $region57: #{tpu_custom_call.1} parent=5 // pred_check
        %p857 = pneg %p856
      $region58: #{tpu_custom_call.1} parent=5 // pred_check_branch
        %859 = sbr.rel (%p857) target = $region60
      $region59: #{tpu_custom_call.1} parent=5 // pred_region
        %s860 = ssub.s32 %s18, 2
        // Predicated region
        $region61: #{tpu_custom_call.1} parent=59 // pred_check
          %p861 = pneg %p209
        $region62: #{tpu_custom_call.1} parent=59 // pred_check_branch
          %863 = sbr.rel (%p861) target = $region64
        $region63: #{tpu_custom_call.1} parent=59 // pred_region
          %s864 = sand.u32 %s194, 1
          %s865 = scalar_lea.sflag [#allocation3], %s864
          %s866 = sand.u32 %s194, 1
          %s867 = smul.addr %s866, 16
          %s868 = scalar_lea.vmem [#allocation2], %s867
          %869 = dma.done %s865, 256
        $region64: #{tpu_custom_call.1} parent=59 // pred_fallthru
          _
        // Predicated region
        $region65: #{tpu_custom_call.1} parent=59 // pred_check
          %p870 = pneg %p235
        $region66: #{tpu_custom_call.1} parent=59 // pred_check_branch
          %872 = sbr.rel (%p870) target = $region68
        $region67: #{tpu_custom_call.1} parent=59 // pred_region
          %p873 = scmp.lt.s32.totalorder %s24, 1
          %s874 = scalar_select %p873, %s24, 1
          %s875 = smul.addr %s874, 2
          %s876 = smul.addr %s875, 4
          %s877 = scalar_lea.vmem %s8, %s876
        $region68: #{tpu_custom_call.1} parent=59 // pred_fallthru
          _
      $region60: #{tpu_custom_call.1} parent=5 // pred_fallthru
        _
    $region6: #{tpu_custom_call.1} parent=1 // loop_footer
      %s22 = sadd.s32 1, %s18
    $region7: #{tpu_custom_call.1} parent=1 // loop_footer_branch
      %17 = sbr.rel target = $region3
    $region8: #{tpu_custom_call.1} parent=1 // loop_exit
      _
    %878 = vsyncpa [#allocation3], 1
    %s879 = scalar_lea.sflag [#allocation3], 1
    %880 = vsyncpa %s879, 1

</llo_original>
